<compile_context>
chip_gen: v7x
topology: tpu7x:2x2x1
jax: 0.10.0
libtpu: 0.0.40
codegen_flags: <defaults>
</compile_context>

<pallas_src>
import functools

import jax
import jax.numpy as jnp
from jax import lax
from jax.experimental import pallas as pl
from jax.experimental.pallas import tpu as pltpu

DEGREE = 3          # component_type='trend' -> Chebyshev order 3
EPS = 1e-5          # nn.LayerNorm default eps


def adaptive_kan_mixer_kernel(x_ref, wkan_ref, kanb_ref, convw_ref, convb_ref,
                              gamma_ref, beta_ref, o_ref, *, seq_len):
    x = x_ref[...]                                   # (TM, C) f32
    tm, c = x.shape
    mxu_dtype = wkan_ref.dtype

    # ---- ChebyKAN linear: T_0 (ones) folded into kanb (f32 colsum of W_0);
    #      degrees 1..DEGREE accumulated on the MXU (bf16 operands, f32 acc). ----
    xt = jnp.tanh(x)                                 # T_1
    acc = kanb_ref[...] + jnp.dot(xt.astype(mxu_dtype), wkan_ref[0],
                                  preferred_element_type=jnp.float32)
    p_prev, p_cur = xt, 2.0 * xt * xt - 1.0          # T_1, T_2 (f32, VPU)
    acc = acc + jnp.dot(p_cur.astype(mxu_dtype), wkan_ref[1],
                        preferred_element_type=jnp.float32)
    for d in range(3, DEGREE + 1):
        p_prev, p_cur = p_cur, 2.0 * xt * p_cur - p_prev   # Chebyshev recurrence
        acc = acc + jnp.dot(p_cur.astype(mxu_dtype), wkan_ref[d - 1],
                            preferred_element_type=jnp.float32)
    x_kan = acc                                      # (TM, C) f32

    # ---- depthwise Conv1d(k=3, pad=1, groups=C) over time, via XLU rolls ----
    # Block rows are batch-aligned (TM % seq_len == 0), so the rolls' wrap rows
    # coincide with the zero-masked sequence-boundary rows.  Boundary masks come
    # from a (TM, 1) iota; the lane broadcast is free.
    # NOTE(perf): verify in a bundle dump that shift=tm-1 lowers to a cheap -1
    # sublane shift rather than a generic large cross-vreg rotate.
    tpos = lax.broadcasted_iota(jnp.int32, (tm, 1), 0) % seq_len
    x_prev = jnp.where(tpos == 0, 0.0, pltpu.roll(x, shift=1, axis=0))
    x_next = jnp.where(tpos == seq_len - 1, 0.0, pltpu.roll(x, shift=tm - 1, axis=0))
    w = convw_ref[...]                               # (3, C)
    x_conv = (w[0:1, :] * x_prev + w[1:2, :] * x + w[2:3, :] * x_next
              + convb_ref[...])                      # (TM, C)

    # ---- residual + LayerNorm over C (sum / sum-of-squares form) ----
    y = x + x_kan + x_conv
    inv_c = 1.0 / c
    mu = jnp.sum(y, axis=-1, keepdims=True) * inv_c
    ex2 = jnp.sum(y * y, axis=-1, keepdims=True) * inv_c
    var = jnp.maximum(ex2 - mu * mu, 0.0)
    out = (y - mu) * lax.rsqrt(var + EPS) * gamma_ref[...] + beta_ref[...]
    o_ref[...] = out.astype(o_ref.dtype)


def _vmem_budget_bytes():
    """Scoped-VMEM cap: physical capacity minus 8 MiB headroom (v7x: 64 -> ~56 MiB),
    capped at 110 MiB on v5e/v6e (128 MiB physical)."""
    phys = 64 << 20
    try:
        info = pltpu.get_tpu_info()
        phys = int(getattr(info, "vmem_capacity_bytes", phys) or phys)
    except Exception:
        pass
    return int(min(phys - (8 << 20), 110 << 20))


def _choose_rows_per_block(B, T, target_rows, min_grid_steps=2):
    """Rows per block: a multiple of T (batch-aligned => the roll-based conv's
    wrap rows are exactly the zero-masked sequence boundaries) that divides B*T
    and is a multiple of 8 sublanes (or the whole fused axis).  Prefer the
    largest such tile <= target_rows that still leaves >= min_grid_steps grid
    steps so both v7x TensorCores get work."""
    M = B * T
    candidates = []
    for nb in range(1, B + 1):
        if B % nb:
            continue
        rows = nb * T
        if rows % 8 != 0 and rows != M:
            continue
        candidates.append(rows)
    pool = [r for r in candidates if M // r >= min_grid_steps] or candidates
    under = [r for r in pool if r <= target_rows]
    return max(under) if under else min(pool)


def adaptive_kan_mixer(x, coeffs, conv_w, conv_b, gamma, beta, *,
                       mxu_dtype=jnp.bfloat16, target_rows=2048):
    """x: (B, T, C) f32.  coeffs: (C_in, C_out, DEGREE+1).  conv_w: (3, C) with
    conv_w[k, c] = torch_weight[c, 0, k].  conv_b, gamma, beta: (C,).
    Use mxu_dtype=jnp.float32 for ~1e-6 agreement with the f32 reference (at
    reduced MXU throughput)."""
    B, T, C = x.shape
    M = B * T
    itemsize = jnp.dtype(x.dtype).itemsize
    msize = jnp.dtype(mxu_dtype).itemsize

    # ---- VMEM budget & tile choice -----------------------------------------
    vmem_budget = _vmem_budget_bytes()
    weight_bytes = DEGREE * C * C * msize + 6 * C * 4
    # ~12 live (TM, C) f32 temporaries in the body + double-buffered in/out tiles
    per_row = 12 * C * 4 + 2 * 2 * C * itemsize
    max_rows = max(T, (vmem_budget // 2 - weight_bytes) // per_row)
    TM = _choose_rows_per_block(B, T, min(target_rows, max_rows))
    # The roll-based depthwise conv requires batch-aligned row tiles.
    assert TM % T == 0 and M % TM == 0, (TM, T, M)
    grid = (M // TM,)

    # ---- weight plumbing (no activation padding / slicing) -------------------
    x2 = x.reshape(M, C)                                        # (M, C), native width
    wkan_all = jnp.transpose(coeffs, (2, 0, 1))                 # (D+1, Cin, Cout)
    kan_bias = jnp.sum(wkan_all[0], axis=0, keepdims=True)      # (1, C) f32: T_0 folded
    wkan = wkan_all[1:].astype(mxu_dtype)                       # (DEGREE, Cin, Cout)
    convb = conv_b.reshape(1, C)
    g = gamma.reshape(1, C)
    bt = beta.reshape(1, C)

    cost = pl.CostEstimate(
        flops=int(2 * M * C * C * DEGREE + 30 * M * C),
        transcendentals=int(M * C),                             # tanh
        bytes_accessed=int(2 * M * C * itemsize + DEGREE * C * C * msize + 6 * C * 4),
    )

    const = pl.Buffered(1)   # grid-invariant operands: single-buffered
    kernel = functools.partial(adaptive_kan_mixer_kernel, seq_len=T)

    out = pl.pallas_call(
        kernel,
        out_shape=jax.ShapeDtypeStruct((M, C), x.dtype),
        grid_spec=pltpu.PrefetchScalarGridSpec(
            num_scalar_prefetch=0,
            grid=grid,
            in_specs=[
                pl.BlockSpec((TM, C), lambda m: (m, 0)),                      # x rows
                pl.BlockSpec((DEGREE, C, C), lambda m: (0, 0, 0),
                             pipeline_mode=const),                           # KAN W_1..W_D
                pl.BlockSpec((1, C), lambda m: (0, 0), pipeline_mode=const),  # KAN T_0 bias
                pl.BlockSpec((3, C), lambda m: (0, 0), pipeline_mode=const),  # conv weights
                pl.BlockSpec((1, C), lambda m: (0, 0), pipeline_mode=const),  # conv bias
                pl.BlockSpec((1, C), lambda m: (0, 0), pipeline_mode=const),  # LN gamma
                pl.BlockSpec((1, C), lambda m: (0, 0), pipeline_mode=const),  # LN beta
            ],
            out_specs=pl.BlockSpec((TM, C), lambda m: (m, 0)),
        ),
        compiler_params=pltpu.CompilerParams(
            dimension_semantics=("parallel",),
            vmem_limit_bytes=vmem_budget),
        cost_estimate=cost,
    )(x2, wkan, kan_bias, conv_w, convb, g, bt)

    return out.reshape(B, T, C)


def reference(x, coeffs, conv_w, conv_b, gamma, beta):
    """Pure-JAX (f32) reference mirroring the PyTorch forward."""
    xt = jnp.tanh(x)
    polys = [jnp.ones_like(xt), xt]
    for _ in range(2, DEGREE + 1):
        polys.append(2.0 * xt * polys[-1] - polys[-2])
    cheb = jnp.stack(polys, axis=-1)                       # (B, T, C, D+1)
    x_kan = jnp.einsum('btid,iod->bto', cheb, coeffs)
    xp = jnp.pad(x, ((0, 0), (1, 1), (0, 0)))
    x_conv = (conv_w[0] * xp[:, :-2] + conv_w[1] * xp[:, 1:-1]
              + conv_w[2] * xp[:, 2:]) + conv_b
    y = x + x_kan + x_conv
    mu = jnp.mean(y, axis=-1, keepdims=True)
    var = jnp.mean((y - mu) ** 2, axis=-1, keepdims=True)
    return (y - mu) / jnp.sqrt(var + EPS) * gamma + beta


if __name__ == "__main__":
    B, T, C = 2, 8, 32                                     # d_model = 32, seq = 8
    key = jax.random.PRNGKey(0)
    kx, kc, kw, kb = jax.random.split(key, 4)

    x = jax.random.normal(kx, (B, T, C), dtype=jnp.float32)

    # ChebyKANLinear coeffs: (in=C, out=C, degree+1), scale 1/(in*(degree+1))
    coeffs = jax.random.normal(kc, (C, C, DEGREE + 1), jnp.float32) / (C * (DEGREE + 1))

    # depthwise Conv1d(d_model, d_model, k=3, pad=1, groups=d_model): torch weight (C,1,3)
    conv_w_torch = jax.random.normal(kw, (C, 1, 3), jnp.float32) * 0.1
    conv_b = jax.random.normal(kb, (C,), jnp.float32) * 0.1
    conv_w = jnp.transpose(conv_w_torch[:, 0, :], (1, 0))  # (3, C)

    gamma = jnp.ones((C,), jnp.float32)
    beta = jnp.zeros((C,), jnp.float32)

    out = adaptive_kan_mixer(x, coeffs, conv_w, conv_b, gamma, beta)
    out = jax.block_until_ready(out)

    ref = reference(x, coeffs, conv_w, conv_b, gamma, beta)
    assert out.shape == (B, T, C)
    # tolerance covers bf16 MXU operands (f32 accumulation) and the E[y^2]-mu^2
    # LayerNorm form; with mxu_dtype=jnp.float32 the kernel matches to ~1e-6.
    max_err = float(jnp.max(jnp.abs(out - ref)))
    assert jnp.allclose(out, ref, atol=3e-3, rtol=3e-3), f"max_err={max_err}"

    print("KERNEL_OK")
</pallas_src>

<mosaic_0001>
module attributes {stable_mosaic.version = 11 : i64} {
  func.func @adaptive_kan_mixer_kernel(%arg0: i32, %arg1: memref<8x32xf32, #tpu.memory_space<vmem>>, %arg2: memref<3x32x32xbf16, #tpu.memory_space<vmem>>, %arg3: memref<1x32xf32, #tpu.memory_space<vmem>>, %arg4: memref<3x32xf32, #tpu.memory_space<vmem>>, %arg5: memref<1x32xf32, #tpu.memory_space<vmem>>, %arg6: memref<1x32xf32, #tpu.memory_space<vmem>>, %arg7: memref<1x32xf32, #tpu.memory_space<vmem>>, %arg8: memref<8x32xf32, #tpu.memory_space<vmem>>) attributes {dimension_semantics = [#tpu.dimension_semantics<parallel>], iteration_bounds = array<i64: 2>, scalar_prefetch = 0 : i64, scratch_operands = 0 : i64, tpu.core_type = #tpu.core_type<tc>, window_params = [{transform_indices = @transform_0, window_bounds = array<i64: 8, 32>}, {pipeline_mode = #tpu.pipeline_mode<synchronous>, transform_indices = @transform_1, window_bounds = array<i64: 3, 32, 32>}, {pipeline_mode = #tpu.pipeline_mode<synchronous>, transform_indices = @transform_2, window_bounds = array<i64: 1, 32>}, {pipeline_mode = #tpu.pipeline_mode<synchronous>, transform_indices = @transform_3, window_bounds = array<i64: 3, 32>}, {pipeline_mode = #tpu.pipeline_mode<synchronous>, transform_indices = @transform_4, window_bounds = array<i64: 1, 32>}, {pipeline_mode = #tpu.pipeline_mode<synchronous>, transform_indices = @transform_5, window_bounds = array<i64: 1, 32>}, {pipeline_mode = #tpu.pipeline_mode<synchronous>, transform_indices = @transform_6, window_bounds = array<i64: 1, 32>}, {transform_indices = @transform_7, window_bounds = array<i64: 8, 32>}]} {
    %c0 = arith.constant 0 : index
    %c0_0 = arith.constant 0 : index
    %0 = vector.load %arg1[%c0, %c0_0] : memref<8x32xf32, #tpu.memory_space<vmem>>, vector<8x32xf32>
    %1 = math.tanh %0 : vector<8x32xf32>
    %c0_1 = arith.constant 0 : index
    %c0_2 = arith.constant 0 : index
    %2 = vector.load %arg3[%c0_1, %c0_2] : memref<1x32xf32, #tpu.memory_space<vmem>>, vector<1x32xf32>
    %3 = arith.truncf %1 : vector<8x32xf32> to vector<8x32xbf16>
    %c0_3 = arith.constant 0 : index
    %c0_4 = arith.constant 0 : index
    %c0_5 = arith.constant 0 : index
    %4 = vector.load %arg2[%c0_3, %c0_4, %c0_5] : memref<3x32x32xbf16, #tpu.memory_space<vmem>>, vector<1x32x32xbf16>
    %5 = vector.shape_cast %4 : vector<1x32x32xbf16> to vector<32x32xbf16>
    %cst = arith.constant dense<0.000000e+00> : vector<8x32xf32>
    %6 = tpu.matmul %3, %5, %cst {dimension_numbers = #tpu.dot_dimension_numbers<[1], [0], [0], [1], [0, 0, 1, 1], [], []>} : vector<8x32xbf16>, vector<32x32xbf16>, vector<8x32xf32> -> vector<8x32xf32>
    %7 = vector.broadcast %2 : vector<1x32xf32> to vector<8x32xf32>
    %8 = arith.addf %7, %6 : vector<8x32xf32>
    %cst_6 = arith.constant 2.000000e+00 : f32
    %9 = vector.broadcast %cst_6 : f32 to vector<8x32xf32>
    %10 = arith.mulf %9, %1 : vector<8x32xf32>
    %11 = arith.mulf %10, %1 : vector<8x32xf32>
    %cst_7 = arith.constant 1.000000e+00 : f32
    %12 = vector.broadcast %cst_7 : f32 to vector<8x32xf32>
    %13 = arith.subf %11, %12 : vector<8x32xf32>
    %14 = arith.truncf %13 : vector<8x32xf32> to vector<8x32xbf16>
    %c1 = arith.constant 1 : index
    %c0_8 = arith.constant 0 : index
    %c0_9 = arith.constant 0 : index
    %15 = vector.load %arg2[%c1, %c0_8, %c0_9] : memref<3x32x32xbf16, #tpu.memory_space<vmem>>, vector<1x32x32xbf16>
    %16 = vector.shape_cast %15 : vector<1x32x32xbf16> to vector<32x32xbf16>
    %cst_10 = arith.constant dense<0.000000e+00> : vector<8x32xf32>
    %17 = tpu.matmul %14, %16, %cst_10 {dimension_numbers = #tpu.dot_dimension_numbers<[1], [0], [0], [1], [0, 0, 1, 1], [], []>} : vector<8x32xbf16>, vector<32x32xbf16>, vector<8x32xf32> -> vector<8x32xf32>
    %18 = arith.addf %8, %17 : vector<8x32xf32>
    %cst_11 = arith.constant 2.000000e+00 : f32
    %19 = vector.broadcast %cst_11 : f32 to vector<8x32xf32>
    %20 = arith.mulf %19, %1 : vector<8x32xf32>
    %21 = arith.mulf %20, %13 : vector<8x32xf32>
    %22 = arith.subf %21, %1 : vector<8x32xf32>
    %23 = arith.truncf %22 : vector<8x32xf32> to vector<8x32xbf16>
    %c2 = arith.constant 2 : index
    %c0_12 = arith.constant 0 : index
    %c0_13 = arith.constant 0 : index
    %24 = vector.load %arg2[%c2, %c0_12, %c0_13] : memref<3x32x32xbf16, #tpu.memory_space<vmem>>, vector<1x32x32xbf16>
    %25 = vector.shape_cast %24 : vector<1x32x32xbf16> to vector<32x32xbf16>
    %cst_14 = arith.constant dense<0.000000e+00> : vector<8x32xf32>
    %26 = tpu.matmul %23, %25, %cst_14 {dimension_numbers = #tpu.dot_dimension_numbers<[1], [0], [0], [1], [0, 0, 1, 1], [], []>} : vector<8x32xbf16>, vector<32x32xbf16>, vector<8x32xf32> -> vector<8x32xf32>
    %27 = arith.addf %18, %26 : vector<8x32xf32>
    %28 = tpu.iota {dimensions = array<i32: 0>} : vector<8x1xi32>
    %c8_i32 = arith.constant 8 : i32
    %c0_i32 = arith.constant 0 : i32
    %29 = arith.cmpi eq, %c8_i32, %c0_i32 : i32
    %c1_i32 = arith.constant 1 : i32
    %30 = arith.select %29, %c1_i32, %c8_i32 : i32
    %31 = vector.broadcast %30 : i32 to vector<8x1xi32>
    %32 = arith.remsi %28, %31 : vector<8x1xi32>
    %c0_i32_15 = arith.constant 0 : i32
    %33 = vector.broadcast %c0_i32_15 : i32 to vector<8x1xi32>
    %34 = arith.cmpi ne, %32, %33 : vector<8x1xi32>
    %c0_i32_16 = arith.constant 0 : i32
    %35 = vector.broadcast %c0_i32_16 : i32 to vector<8x1xi32>
    %36 = arith.cmpi slt, %32, %35 : vector<8x1xi32>
    %c0_i32_17 = arith.constant 0 : i32
    %37 = arith.cmpi slt, %30, %c0_i32_17 : i32
    %38 = vector.broadcast %37 : i1 to vector<8x1xi1>
    %39 = vector.broadcast %38 : vector<8x1xi1> to vector<8x1xi1>
    %40 = arith.xori %36, %39 : vector<8x1xi1>
    %41 = arith.andi %40, %34 : vector<8x1xi1>
    %42 = vector.broadcast %30 : i32 to vector<8x1xi32>
    %43 = arith.addi %32, %42 : vector<8x1xi32>
    %44 = arith.select %41, %43, %32 : vector<8x1xi1>, vector<8x1xi32>
    %c0_i32_18 = arith.constant 0 : i32
    %45 = vector.broadcast %c0_i32_18 : i32 to vector<8x1xi32>
    %46 = arith.cmpi eq, %44, %45 : vector<8x1xi32>
    %c1_i32_19 = arith.constant 1 : i32
    %47 = tpu.dynamic_rotate %0 by %c1_i32_19 dim 0 : vector<8x32xf32>, i32 -> vector<8x32xf32>
    %cst_20 = arith.constant 0.000000e+00 : f32
    %48 = vector.shape_cast %46 : vector<8x1xi1> to vector<8x1xi1>
    %49 = vector.broadcast %48 : vector<8x1xi1> to vector<8x32xi1>
    %50 = vector.broadcast %cst_20 : f32 to vector<8x32xf32>
    %51 = arith.select %49, %50, %47 : vector<8x32xi1>, vector<8x32xf32>
    %c7_i32 = arith.constant 7 : i32
    %52 = vector.broadcast %c7_i32 : i32 to vector<8x1xi32>
    %53 = arith.cmpi eq, %44, %52 : vector<8x1xi32>
    %c7_i32_21 = arith.constant 7 : i32
    %54 = tpu.dynamic_rotate %0 by %c7_i32_21 dim 0 : vector<8x32xf32>, i32 -> vector<8x32xf32>
    %cst_22 = arith.constant 0.000000e+00 : f32
    %55 = vector.shape_cast %53 : vector<8x1xi1> to vector<8x1xi1>
    %56 = vector.broadcast %55 : vector<8x1xi1> to vector<8x32xi1>
    %57 = vector.broadcast %cst_22 : f32 to vector<8x32xf32>
    %58 = arith.select %56, %57, %54 : vector<8x32xi1>, vector<8x32xf32>
    %c0_23 = arith.constant 0 : index
    %c0_24 = arith.constant 0 : index
    %59 = vector.load %arg4[%c0_23, %c0_24] : memref<3x32xf32, #tpu.memory_space<vmem>>, vector<3x32xf32>
    %60 = vector.extract_strided_slice %59 {offsets = [0, 0], sizes = [1, 32], strides = [1, 1]} : vector<3x32xf32> to vector<1x32xf32>
    %61 = vector.broadcast %60 : vector<1x32xf32> to vector<8x32xf32>
    %62 = arith.mulf %61, %51 : vector<8x32xf32>
    %63 = vector.extract_strided_slice %59 {offsets = [1, 0], sizes = [1, 32], strides = [1, 1]} : vector<3x32xf32> to vector<1x32xf32>
    %64 = vector.broadcast %63 : vector<1x32xf32> to vector<8x32xf32>
    %65 = arith.mulf %64, %0 : vector<8x32xf32>
    %66 = arith.addf %62, %65 : vector<8x32xf32>
    %67 = vector.extract_strided_slice %59 {offsets = [2, 0], sizes = [1, 32], strides = [1, 1]} : vector<3x32xf32> to vector<1x32xf32>
    %68 = vector.broadcast %67 : vector<1x32xf32> to vector<8x32xf32>
    %69 = arith.mulf %68, %58 : vector<8x32xf32>
    %70 = arith.addf %66, %69 : vector<8x32xf32>
    %c0_25 = arith.constant 0 : index
    %c0_26 = arith.constant 0 : index
    %71 = vector.load %arg5[%c0_25, %c0_26] : memref<1x32xf32, #tpu.memory_space<vmem>>, vector<1x32xf32>
    %72 = vector.broadcast %71 : vector<1x32xf32> to vector<8x32xf32>
    %73 = arith.addf %70, %72 : vector<8x32xf32>
    %74 = arith.addf %0, %27 : vector<8x32xf32>
    %75 = arith.addf %74, %73 : vector<8x32xf32>
    %cst_27 = arith.constant dense<0.000000e+00> : vector<8xf32>
    %76 = vector.multi_reduction <add>, %75, %cst_27 [1] : vector<8x32xf32> to vector<8xf32>
    %77 = vector.shape_cast %76 : vector<8xf32> to vector<8x1xf32>
    %cst_28 = arith.constant 3.125000e-02 : f32
    %78 = vector.broadcast %cst_28 : f32 to vector<8x1xf32>
    %79 = arith.mulf %77, %78 : vector<8x1xf32>
    %80 = arith.mulf %75, %75 : vector<8x32xf32>
    %cst_29 = arith.constant dense<0.000000e+00> : vector<8xf32>
    %81 = vector.multi_reduction <add>, %80, %cst_29 [1] : vector<8x32xf32> to vector<8xf32>
    %82 = vector.shape_cast %81 : vector<8xf32> to vector<8x1xf32>
    %cst_30 = arith.constant 3.125000e-02 : f32
    %83 = vector.broadcast %cst_30 : f32 to vector<8x1xf32>
    %84 = arith.mulf %82, %83 : vector<8x1xf32>
    %85 = arith.mulf %79, %79 : vector<8x1xf32>
    %86 = arith.subf %84, %85 : vector<8x1xf32>
    %cst_31 = arith.constant 0.000000e+00 : f32
    %87 = vector.broadcast %cst_31 : f32 to vector<8x1xf32>
    %88 = arith.maximumf %86, %87 : vector<8x1xf32>
    %89 = vector.broadcast %79 : vector<8x1xf32> to vector<8x32xf32>
    %90 = arith.subf %75, %89 : vector<8x32xf32>
    %cst_32 = arith.constant 9.99999974E-6 : f32
    %91 = vector.broadcast %cst_32 : f32 to vector<8x1xf32>
    %92 = arith.addf %88, %91 : vector<8x1xf32>
    %93 = math.rsqrt %92 : vector<8x1xf32>
    %94 = vector.broadcast %93 : vector<8x1xf32> to vector<8x32xf32>
    %95 = arith.mulf %90, %94 : vector<8x32xf32>
    %c0_33 = arith.constant 0 : index
    %c0_34 = arith.constant 0 : index
    %96 = vector.load %arg6[%c0_33, %c0_34] : memref<1x32xf32, #tpu.memory_space<vmem>>, vector<1x32xf32>
    %97 = vector.broadcast %96 : vector<1x32xf32> to vector<8x32xf32>
    %98 = arith.mulf %95, %97 : vector<8x32xf32>
    %c0_35 = arith.constant 0 : index
    %c0_36 = arith.constant 0 : index
    %99 = vector.load %arg7[%c0_35, %c0_36] : memref<1x32xf32, #tpu.memory_space<vmem>>, vector<1x32xf32>
    %100 = vector.broadcast %99 : vector<1x32xf32> to vector<8x32xf32>
    %101 = arith.addf %98, %100 : vector<8x32xf32>
    %c0_37 = arith.constant 0 : index
    %c0_38 = arith.constant 0 : index
    %102 = vector.load %arg8[%c0_37, %c0_38] : memref<8x32xf32, #tpu.memory_space<vmem>>, vector<8x32xf32>
    tpu.vector_store %arg8[%c0_37, %c0_38], %101 {strides = array<i32>} : memref<8x32xf32, #tpu.memory_space<vmem>>, vector<8x32xf32>,
    return
  }
  func.func @transform_0(%arg0: i32) -> (i32, i32) {
    %c0_i32 = arith.constant 0 : i32
    %c0_i32_0 = arith.constant 0 : i32
    return %arg0, %c0_i32 : i32, i32
  }
  func.func @transform_1(%arg0: i32) -> (i32, i32, i32) {
    %c0_i32 = arith.constant 0 : i32
    %c0_i32_0 = arith.constant 0 : i32
    %c0_i32_1 = arith.constant 0 : i32
    %c0_i32_2 = arith.constant 0 : i32
    return %c0_i32, %c0_i32_0, %c0_i32_1 : i32, i32, i32
  }
  func.func @transform_2(%arg0: i32) -> (i32, i32) {
    %c0_i32 = arith.constant 0 : i32
    %c0_i32_0 = arith.constant 0 : i32
    %c0_i32_1 = arith.constant 0 : i32
    return %c0_i32, %c0_i32_0 : i32, i32
  }
  func.func @transform_3(%arg0: i32) -> (i32, i32) {
    %c0_i32 = arith.constant 0 : i32
    %c0_i32_0 = arith.constant 0 : i32
    %c0_i32_1 = arith.constant 0 : i32
    return %c0_i32, %c0_i32_0 : i32, i32
  }
  func.func @transform_4(%arg0: i32) -> (i32, i32) {
    %c0_i32 = arith.constant 0 : i32
    %c0_i32_0 = arith.constant 0 : i32
    %c0_i32_1 = arith.constant 0 : i32
    return %c0_i32, %c0_i32_0 : i32, i32
  }
  func.func @transform_5(%arg0: i32) -> (i32, i32) {
    %c0_i32 = arith.constant 0 : i32
    %c0_i32_0 = arith.constant 0 : i32
    %c0_i32_1 = arith.constant 0 : i32
    return %c0_i32, %c0_i32_0 : i32, i32
  }
  func.func @transform_6(%arg0: i32) -> (i32, i32) {
    %c0_i32 = arith.constant 0 : i32
    %c0_i32_0 = arith.constant 0 : i32
    %c0_i32_1 = arith.constant 0 : i32
    return %c0_i32, %c0_i32_0 : i32, i32
  }
  func.func @transform_7(%arg0: i32) -> (i32, i32) {
    %c0_i32 = arith.constant 0 : i32
    %c0_i32_0 = arith.constant 0 : i32
    return %arg0, %c0_i32 : i32, i32
  }
}

</mosaic_0001>

<llo_original>
// kernel: tpu_custom_call.1
$region0: #{tpu_custom_call.1}
  #allocation0 [shape = 'u32[]', space=smem, size = 0x4, offset = 0x4, fixed_abs, tag = 'smem constant byte address 0x4 - core index']
  #allocation1 [shape = 'u32[144,128]{1,0:T(1,128)}', space=vmem, size = 0x12000, scoped, tag = 'internal scratch']
  %s0 = inlined_call_operand.hbm [shape: f32[16,32], index: 0, kind: input, shape index: {}]
  %s1 = inlined_call_operand.hbm [shape: bf16[3,32,32], index: 1, kind: input, shape index: {}]
  %s2 = inlined_call_operand.vmem [shape: f32[1,32], index: 2, kind: input, shape index: {}]
  %s3 = inlined_call_operand.vmem [shape: f32[3,32], index: 3, kind: input, shape index: {}]
  %s4 = inlined_call_operand.vmem [shape: f32[1,32], index: 4, kind: input, shape index: {}]
  %s5 = inlined_call_operand.vmem [shape: f32[1,32], index: 5, kind: input, shape index: {}]
  %s6 = inlined_call_operand.vmem [shape: f32[1,32], index: 6, kind: input, shape index: {}]
  %s7 = inlined_call_operand.hbm [shape: f32[16,32], index: 7, kind: output, shape index: {}]
  %s8 = sld [smem:[#allocation0]]
  $region69: #{tpu_custom_call.1} parent=0
    _
  %s10 = ssub.s32 1, %s8
  %s11 = scalar_select 0, %s10, %s8
  $region1: #{tpu_custom_call.1} parent=0
    #allocation2 [shape = 'u8[8192]{0}', space=vmem, size = 0x2000, scoped, tag = 'input window, operand 0']
    #allocation3 [shape = 's32[2]{0}', space=sflag, size = 0x8, scoped, tag = 'scoped memory for tpu_custom_call.1']
    #allocation4 [shape = 's32[2]{0}', space=sflag, size = 0x8, scoped, tag = 'scoped memory for tpu_custom_call.1']
    #allocation5 [shape = 'u8[24576]{0}', space=vmem, size = 0x6000, scoped, tag = 'input window, operand 1, single buffered']
    #allocation6 [shape = 's32[1]{0}', space=sflag, size = 0x4, scoped, tag = 'scoped memory for tpu_custom_call.1']
    #allocation7 [shape = 'u8[8192]{0}', space=vmem, size = 0x2000, scoped, tag = 'output window, operand 0']
    %12 = vsyncpa [#allocation3], 0
    %s13 = scalar_lea.sflag [#allocation3], 1
    %14 = vsyncpa %s13, 0
    %15 = vsyncpa [#allocation6], 0
    %16 = vsyncpa [#allocation4], 0
    %s17 = scalar_lea.sflag [#allocation4], 1
    %18 = vsyncpa %s17, 0
    loop: start=0, step=1, limit=4
    $region2: #{tpu_custom_call.1} parent=1 // loop_pre_header
      _
    $region3: #{tpu_custom_call.1} parent=1 // loop_header
      %s20 = sphi 0, %s24
      %p21 = scmp.ge.s32.totalorder %s20, 4
      %s30 = sphi 0, %s32
      %s33 = sphi 0, %s30
      %s34 = sphi 0, %s33
      %s50 = sphi 0, %s34
      %s54 = sphi 0, %s54
      %s56 = sphi 0, %s54
      %s57 = sphi 0, %s56
      %s71 = sphi 0, %s57
      %s75 = sphi 0, %s75
      %s77 = sphi 0, %s75
      %s78 = sphi 0, %s77
      %s92 = sphi 0, %s78
      %s96 = sphi 0, %s96
      %s98 = sphi 0, %s96
      %s99 = sphi 0, %s98
      %s113 = sphi 0, %s99
      %s117 = sphi 0, %s117
      %s119 = sphi 0, %s117
      %s120 = sphi 0, %s119
      %s134 = sphi 0, %s120
      %s138 = sphi 0, %s138
      %s140 = sphi 0, %s138
      %s141 = sphi 0, %s140
      %s155 = sphi 0, %s141
      %s159 = sphi 0, %s159
      %s161 = sphi 0, %s159
      %s162 = sphi 0, %s161
      %s176 = sphi 0, %s162
      %s182 = sphi 0, %s184
      %s185 = sphi 0, %s182
      %s186 = sphi 0, %s185
      %s202 = sphi 0, %s186
    $region4: #{tpu_custom_call.1} parent=1 // loop_header_branch
      %23 = sbr.rel (%p21) target = $region8
    $region5: #{tpu_custom_call.1} parent=1 // loop_body
      %s25 = ssub.s32 %s20, 1
      %s26 = ssub.s32 %s20, 2
      %s27 = sadd.s32 %s20, 1
      %s28 = ssub.s32 %s20, %s27
      %p29 = scmp.eq.s32.totalorder %s28, 0
      %s31 = sadd.s32 %s30, 1
      %s32 = scalar_select %p29, %s30, %s31
      %p35 = pneg %p29
      %p36 = scmp.eq.s32.totalorder %s20, 1
      %p37 = por %p35, %p36
      %p38 = scmp.ne.s32.totalorder %s30, %s33
      %p39 = scmp.eq.s32.totalorder %s20, 0
      %p40 = por %p38, %p39
      %p41 = scmp.ne.s32.totalorder %s30, %s33
      %p42 = scmp.eq.s32.totalorder %s25, 1
      %p43 = por %p41, %p42
      %p44 = scmp.ne.s32.totalorder %s33, %s34
      %p45 = scmp.eq.s32.totalorder %s25, 0
      %p46 = por %p44, %p45
      %p47 = scmp.ne.s32.totalorder %s33, %s34
      %p48 = scmp.eq.s32.totalorder %s26, 1
      %p49 = por %p47, %p48
      %p51 = scmp.ne.s32.totalorder %s34, %s50
      %p52 = scmp.eq.s32.totalorder %s26, 0
      %p53 = por %p51, %p52
      %s55 = sadd.s32 %s54, 1
      %p58 = scmp.eq.s32.totalorder %s20, 1
      %p59 = scmp.ne.s32.totalorder %s54, %s56
      %p60 = scmp.eq.s32.totalorder %s20, 0
      %p61 = por %p59, %p60
      %p62 = scmp.ne.s32.totalorder %s54, %s56
      %p63 = scmp.eq.s32.totalorder %s25, 1
      %p64 = por %p62, %p63
      %p65 = scmp.ne.s32.totalorder %s56, %s57
      %p66 = scmp.eq.s32.totalorder %s25, 0
      %p67 = por %p65, %p66
      %p68 = scmp.ne.s32.totalorder %s56, %s57
      %p69 = scmp.eq.s32.totalorder %s26, 1
      %p70 = por %p68, %p69
      %p72 = scmp.ne.s32.totalorder %s57, %s71
      %p73 = scmp.eq.s32.totalorder %s26, 0
      %p74 = por %p72, %p73
      %s76 = sadd.s32 %s75, 1
      %p79 = scmp.eq.s32.totalorder %s20, 1
      %p80 = scmp.ne.s32.totalorder %s75, %s77
      %p81 = scmp.eq.s32.totalorder %s20, 0
      %p82 = por %p80, %p81
      %p83 = scmp.ne.s32.totalorder %s75, %s77
      %p84 = scmp.eq.s32.totalorder %s25, 1
      %p85 = por %p83, %p84
      %p86 = scmp.ne.s32.totalorder %s77, %s78
      %p87 = scmp.eq.s32.totalorder %s25, 0
      %p88 = por %p86, %p87
      %p89 = scmp.ne.s32.totalorder %s77, %s78
      %p90 = scmp.eq.s32.totalorder %s26, 1
      %p91 = por %p89, %p90
      %p93 = scmp.ne.s32.totalorder %s78, %s92
      %p94 = scmp.eq.s32.totalorder %s26, 0
      %p95 = por %p93, %p94
      %s97 = sadd.s32 %s96, 1
      %p100 = scmp.eq.s32.totalorder %s20, 1
      %p101 = scmp.ne.s32.totalorder %s96, %s98
      %p102 = scmp.eq.s32.totalorder %s20, 0
      %p103 = por %p101, %p102
      %p104 = scmp.ne.s32.totalorder %s96, %s98
      %p105 = scmp.eq.s32.totalorder %s25, 1
      %p106 = por %p104, %p105
      %p107 = scmp.ne.s32.totalorder %s98, %s99
      %p108 = scmp.eq.s32.totalorder %s25, 0
      %p109 = por %p107, %p108
      %p110 = scmp.ne.s32.totalorder %s98, %s99
      %p111 = scmp.eq.s32.totalorder %s26, 1
      %p112 = por %p110, %p111
      %p114 = scmp.ne.s32.totalorder %s99, %s113
      %p115 = scmp.eq.s32.totalorder %s26, 0
      %p116 = por %p114, %p115
      %s118 = sadd.s32 %s117, 1
      %p121 = scmp.eq.s32.totalorder %s20, 1
      %p122 = scmp.ne.s32.totalorder %s117, %s119
      %p123 = scmp.eq.s32.totalorder %s20, 0
      %p124 = por %p122, %p123
      %p125 = scmp.ne.s32.totalorder %s117, %s119
      %p126 = scmp.eq.s32.totalorder %s25, 1
      %p127 = por %p125, %p126
      %p128 = scmp.ne.s32.totalorder %s119, %s120
      %p129 = scmp.eq.s32.totalorder %s25, 0
      %p130 = por %p128, %p129
      %p131 = scmp.ne.s32.totalorder %s119, %s120
      %p132 = scmp.eq.s32.totalorder %s26, 1
      %p133 = por %p131, %p132
      %p135 = scmp.ne.s32.totalorder %s120, %s134
      %p136 = scmp.eq.s32.totalorder %s26, 0
      %p137 = por %p135, %p136
      %s139 = sadd.s32 %s138, 1
      %p142 = scmp.eq.s32.totalorder %s20, 1
      %p143 = scmp.ne.s32.totalorder %s138, %s140
      %p144 = scmp.eq.s32.totalorder %s20, 0
      %p145 = por %p143, %p144
      %p146 = scmp.ne.s32.totalorder %s138, %s140
      %p147 = scmp.eq.s32.totalorder %s25, 1
      %p148 = por %p146, %p147
      %p149 = scmp.ne.s32.totalorder %s140, %s141
      %p150 = scmp.eq.s32.totalorder %s25, 0
      %p151 = por %p149, %p150
      %p152 = scmp.ne.s32.totalorder %s140, %s141
      %p153 = scmp.eq.s32.totalorder %s26, 1
      %p154 = por %p152, %p153
      %p156 = scmp.ne.s32.totalorder %s141, %s155
      %p157 = scmp.eq.s32.totalorder %s26, 0
      %p158 = por %p156, %p157
      %s160 = sadd.s32 %s159, 1
      %p163 = scmp.eq.s32.totalorder %s20, 1
      %p164 = scmp.ne.s32.totalorder %s159, %s161
      %p165 = scmp.eq.s32.totalorder %s20, 0
      %p166 = por %p164, %p165
      %p167 = scmp.ne.s32.totalorder %s159, %s161
      %p168 = scmp.eq.s32.totalorder %s25, 1
      %p169 = por %p167, %p168
      %p170 = scmp.ne.s32.totalorder %s161, %s162
      %p171 = scmp.eq.s32.totalorder %s25, 0
      %p172 = por %p170, %p171
      %p173 = scmp.ne.s32.totalorder %s161, %s162
      %p174 = scmp.eq.s32.totalorder %s26, 1
      %p175 = por %p173, %p174
      %p177 = scmp.ne.s32.totalorder %s162, %s176
      %p178 = scmp.eq.s32.totalorder %s26, 0
      %p179 = por %p177, %p178
      %s180 = ssub.s32 %s20, %s27
      %p181 = scmp.eq.s32.totalorder %s180, 0
      %s183 = sadd.s32 %s182, 1
      %s184 = scalar_select %p181, %s182, %s183
      %p187 = pneg %p181
      %p188 = scmp.eq.s32.totalorder %s20, 1
      %p189 = por %p187, %p188
      %p190 = scmp.ne.s32.totalorder %s182, %s185
      %p191 = scmp.eq.s32.totalorder %s20, 0
      %p192 = por %p190, %p191
      %p193 = scmp.ne.s32.totalorder %s182, %s185
      %p194 = scmp.eq.s32.totalorder %s25, 1
      %p195 = por %p193, %p194
      %p196 = scmp.ne.s32.totalorder %s185, %s186
      %p197 = scmp.eq.s32.totalorder %s25, 0
      %p198 = por %p196, %p197
      %p199 = scmp.ne.s32.totalorder %s185, %s186
      %p200 = scmp.eq.s32.totalorder %s26, 1
      %p201 = por %p199, %p200
      %p203 = scmp.ne.s32.totalorder %s186, %s202
      %p204 = scmp.eq.s32.totalorder %s26, 0
      %p205 = por %p203, %p204
      %p206 = scmp.le.s32.totalorder 1, %s20
      %p207 = scmp.lt.s32.totalorder %s20, 3
      %p208 = pnand %p206, %p207
      %p209 = pneg %p208
      // Predicated region
      $region9: #{tpu_custom_call.1} parent=5 // pred_check
        _
      $region10: #{tpu_custom_call.1} parent=5 // pred_check_branch
        %211 = sbr.rel (%p208) target = $region12
      $region11: #{tpu_custom_call.1} parent=5 // pred_region
        %s212 = ssub.s32 %s20, 1
        // Predicated region
        $region13: #{tpu_custom_call.1} parent=11 // pred_check
          %p213 = pneg %p67
        $region14: #{tpu_custom_call.1} parent=11 // pred_check_branch
          %215 = sbr.rel (%p213) target = $region16
        $region15: #{tpu_custom_call.1} parent=11 // pred_region
          %s217 = ssub.s32 768, 768
          %218 = vsyncadd [#allocation6], %s217
          %s219 = sshll.u32 [#allocation5], 4
          %s220 = int_to_ptr.vmem [resolvable:$true] %s219
          %225 = dma.hbm_to_vmem [thread:$0]  %s1, 768, %s220, [#allocation6], 64, 64, 4
        $region16: #{tpu_custom_call.1} parent=11 // pred_fallthru
          _
        // Predicated region
        $region17: #{tpu_custom_call.1} parent=11 // pred_check
          %p226 = pneg %p88
        $region18: #{tpu_custom_call.1} parent=11 // pred_check_branch
          %228 = sbr.rel (%p226) target = $region20
        $region19: #{tpu_custom_call.1} parent=11 // pred_region
          _
        $region20: #{tpu_custom_call.1} parent=11 // pred_fallthru
          _
        // Predicated region
        $region21: #{tpu_custom_call.1} parent=11 // pred_check
          %p229 = pneg %p109
        $region22: #{tpu_custom_call.1} parent=11 // pred_check_branch
          %231 = sbr.rel (%p229) target = $region24
        $region23: #{tpu_custom_call.1} parent=11 // pred_region
          _
        $region24: #{tpu_custom_call.1} parent=11 // pred_fallthru
          _
        // Predicated region
        $region25: #{tpu_custom_call.1} parent=11 // pred_check
          %p232 = pneg %p130
        $region26: #{tpu_custom_call.1} parent=11 // pred_check_branch
          %234 = sbr.rel (%p232) target = $region28
        $region27: #{tpu_custom_call.1} parent=11 // pred_region
          _
        $region28: #{tpu_custom_call.1} parent=11 // pred_fallthru
          _
        // Predicated region
        $region29: #{tpu_custom_call.1} parent=11 // pred_check
          %p235 = pneg %p151
        $region30: #{tpu_custom_call.1} parent=11 // pred_check_branch
          %237 = sbr.rel (%p235) target = $region32
        $region31: #{tpu_custom_call.1} parent=11 // pred_region
          _
        $region32: #{tpu_custom_call.1} parent=11 // pred_fallthru
          _
        // Predicated region
        $region33: #{tpu_custom_call.1} parent=11 // pred_check
          %p238 = pneg %p172
        $region34: #{tpu_custom_call.1} parent=11 // pred_check_branch
          %240 = sbr.rel (%p238) target = $region36
        $region35: #{tpu_custom_call.1} parent=11 // pred_region
          _
        $region36: #{tpu_custom_call.1} parent=11 // pred_fallthru
          _
      $region12: #{tpu_custom_call.1} parent=5 // pred_fallthru
        _
      %p241 = scmp.lt.s32.totalorder %s20, 2
      // Predicated region
      $region37: #{tpu_custom_call.1} parent=5 // pred_check
        %p242 = pneg %p241
      $region38: #{tpu_custom_call.1} parent=5 // pred_check_branch
        %244 = sbr.rel (%p242) target = $region40
      $region39: #{tpu_custom_call.1} parent=5 // pred_region
        // Predicated region
        $region41: #{tpu_custom_call.1} parent=39 // pred_check
          %p245 = pneg %p40
        $region42: #{tpu_custom_call.1} parent=39 // pred_check_branch
          %247 = sbr.rel (%p245) target = $region44
        $region43: #{tpu_custom_call.1} parent=39 // pred_region
          %s248 = sand.u32 %s30, 1
          %s249 = scalar_lea.sflag [#allocation3], %s248
          %s250 = sand.u32 %s30, 1
          %s251 = smul.addr %s250, 8
          %s252 = scalar_lea.vmem [#allocation2], %s251
          %s254 = ssub.s32 128, 128
          %255 = vsyncadd %s249, %s254
          %s256 = smul.addr %s20, 128
          %s257 = scalar_lea.hbm %s0, %s256
          %s259 = sshll.u32 %s252, 4
          %s260 = int_to_ptr.vmem [resolvable:$true] %s259
          %262 = dma.hbm_to_vmem [thread:$0]  %s257, 128, %s260, %s249
        $region44: #{tpu_custom_call.1} parent=39 // pred_fallthru
          _
      $region40: #{tpu_custom_call.1} parent=5 // pred_fallthru
        _
      %p263 = scmp.le.s32.totalorder 1, %s20
      %p264 = scmp.lt.s32.totalorder %s20, 3
      %p265 = pnand %p263, %p264
      %p266 = pneg %p265
      // Predicated region
      $region45: #{tpu_custom_call.1} parent=5 // pred_check
        _
      $region46: #{tpu_custom_call.1} parent=5 // pred_check_branch
        %268 = sbr.rel (%p265) target = $region48
      $region47: #{tpu_custom_call.1} parent=5 // pred_region
        %s269 = ssub.s32 %s20, 1
        %s270 = sand.u32 %s33, 1
        %s271 = scalar_lea.sflag [#allocation3], %s270
        %s272 = sand.u32 %s33, 1
        %s273 = smul.addr %s272, 8
        %s274 = scalar_lea.vmem [#allocation2], %s273
        // Predicated region
        $region49: #{tpu_custom_call.1} parent=47 // pred_check
          %p275 = pneg %p46
        $region50: #{tpu_custom_call.1} parent=47 // pred_check_branch
          %277 = sbr.rel (%p275) target = $region52
        $region51: #{tpu_custom_call.1} parent=47 // pred_region
          %278 = dma.done %s271, 128
        $region52: #{tpu_custom_call.1} parent=47 // pred_fallthru
          _
        // Predicated region
        $region53: #{tpu_custom_call.1} parent=47 // pred_check
          %p279 = pneg %p67
        $region54: #{tpu_custom_call.1} parent=47 // pred_check_branch
          %281 = sbr.rel (%p279) target = $region56
        $region55: #{tpu_custom_call.1} parent=47 // pred_region
          %282 = dma.done [#allocation6], 768
        $region56: #{tpu_custom_call.1} parent=47 // pred_fallthru
          _
        %s283 = sand.u32 %s33, 1
        %s284 = scalar_lea.sflag [#allocation3], %s283
        %s285 = sand.u32 %s33, 1
        %s286 = smul.addr %s285, 8
        %s287 = scalar_lea.vmem [#allocation2], %s286
        %p288 = pneg %p46
        %p289 = pneg %p43
        %p290 = pneg %p67
        %p291 = pneg %p64
        %p292 = pneg %p88
        %p293 = pneg %p85
        %p294 = pneg %p109
        %p295 = pneg %p106
        %p296 = pneg %p130
        %p297 = pneg %p127
        %p298 = pneg %p151
        %p299 = pneg %p148
        %p300 = pneg %p172
        %p301 = pneg %p169
        %p302 = pneg %p198
        %p303 = pneg %p195
        %s304 = sand.u32 %s185, 1
        %s305 = scalar_lea.sflag [#allocation4], %s304
        %s306 = sand.u32 %s185, 1
        %s307 = smul.addr %s306, 8
        %s308 = scalar_lea.vmem [#allocation7], %s307
        %v310 = vld [vmem:[%s274] sm:$0xff]
        %v311 = vtanh.pop %v310
        %v312 = vld [vmem:[%s2] sm:$0x1]
        %v313 = vpack.c.bf16 %v311, %v311
        %v314 = vld [vmem:[#allocation5] sm:$0xf]
        %v315 = vld [vmem:[#allocation5 + $0x4] sm:$0xf]
        %v316 = vld [vmem:[#allocation5 + $0x8] sm:$0xf]
        %v317 = vld [vmem:[#allocation5 + $0xc] sm:$0xf]
        %v322 = vunpack.c.l.b16 %v314
        %v323 = vunpack.c.l.b16 %v315
        %v324 = vunpack.c.l.b16 %v316
        %v325 = vunpack.c.l.b16 %v317
        %v326 = vpack.c.b16 %v323, %v322
        %v327 = vpack.c.b16 %v325, %v324
        %vm330 = vcmask 261120
        %v332 = vsel %vm330, %v313, 0
        %334 = vmatprep.subr.bf16.mxu0 0
        %335 = vmatpush1.bf16.msra.mxu0 %v326
        %336 = vmatprep.subr.bf16.mxu0 0
        %337 = vmatpush1.bf16.msra.mxu0 %v327
        %338 = vmatprep.subr.bf16.mxu0 0
        %339 = vmatpush1.bf16.msra.mxu0 0
        %340 = vmatprep.subr.bf16.mxu0 0
        %341 = vmatpush1.bf16.msra.mxu0 0
        %342 = vmatprep.subr.bf16.mxu0 0
        %343 = vmatpush1.bf16.msra.mxu0 0
        %344 = vmatprep.subr.bf16.mxu0 0
        %345 = vmatpush1.bf16.msra.mxu0 0
        %346 = vmatprep.subr.bf16.mxu0 0
        %347 = vmatpush1.bf16.msra.mxu0 0
        %348 = vmatprep.subr.bf16.mxu0 0
        %349 = vmatpush1.bf16.msra.mxu0 0
        %350 = vmatprep.subr.bf16.mxu0 0
        %351 = vmatpush1.bf16.msra.mxu0 0
        %352 = vmatprep.subr.bf16.mxu0 0
        %353 = vmatpush1.bf16.msra.mxu0 0
        %354 = vmatprep.subr.bf16.mxu0 0
        %355 = vmatpush1.bf16.msra.mxu0 0
        %356 = vmatprep.subr.bf16.mxu0 0
        %357 = vmatpush1.bf16.msra.mxu0 0
        %358 = vmatprep.subr.bf16.mxu0 0
        %359 = vmatpush1.bf16.msra.mxu0 0
        %360 = vmatprep.subr.bf16.mxu0 0
        %361 = vmatpush1.bf16.msra.mxu0 0
        %362 = vmatprep.subr.bf16.mxu0 0
        %363 = vmatpush1.bf16.msra.mxu0 0
        %364 = vmatprep.subr.bf16.mxu0 0
        %365 = vmatpush1.bf16.msra.mxu0 0
        %366 = vmatprep.mubr.bf16.mxu0 0
        %367 = vmatmul.mubr.bf16.gmra.mrb[0].mxu0 %v332
        %v368 = vpop.f32.mrb[0].mxu0
        %v369 = vadd.f32 0.0, %v368
        %v370 = vpop.f32.mrb[0].mxu0
        %v371 = vpop.f32.mrb[0].mxu0
        %v372 = vpop.f32.mrb[0].mxu0
        %373 = vdwg.mxu0
        %v375 = vlaneseq
        %v376 = vshrl.u32 %v375, 7
        %v377 = vsub.s32 0, %v376
        %v378 = vrot.slane %v312, %v377
        %v380 = vadd.f32 %v378, %v369
        %v381 = vmul.f32 %v311, 2.0
        %v382 = vmul.f32 %v381, %v311
        %v383 = vsub.f32 %v382, 1.0
        %v384 = vpack.c.bf16 %v383, %v383
        %s385 = scalar_lea.vmem [#allocation5], 16
        %v386 = vld [vmem:[%s385] sm:$0xf]
        %v387 = vld [vmem:[%s385 + $0x4] sm:$0xf]
        %v388 = vld [vmem:[%s385 + $0x8] sm:$0xf]
        %v389 = vld [vmem:[%s385 + $0xc] sm:$0xf]
        %v394 = vunpack.c.l.b16 %v386
        %v395 = vunpack.c.l.b16 %v387
        %v396 = vunpack.c.l.b16 %v388
        %v397 = vunpack.c.l.b16 %v389
        %v398 = vpack.c.b16 %v395, %v394
        %v399 = vpack.c.b16 %v397, %v396
        %v403 = vsel %vm330, %v384, 0
        %405 = vmatprep.subr.bf16.mxu0 0
        %406 = vmatpush1.bf16.msra.mxu0 %v398
        %407 = vmatprep.subr.bf16.mxu0 0
        %408 = vmatpush1.bf16.msra.mxu0 %v399
        %409 = vmatprep.subr.bf16.mxu0 0
        %410 = vmatpush1.bf16.msra.mxu0 0
        %411 = vmatprep.subr.bf16.mxu0 0
        %412 = vmatpush1.bf16.msra.mxu0 0
        %413 = vmatprep.subr.bf16.mxu0 0
        %414 = vmatpush1.bf16.msra.mxu0 0
        %415 = vmatprep.subr.bf16.mxu0 0
        %416 = vmatpush1.bf16.msra.mxu0 0
        %417 = vmatprep.subr.bf16.mxu0 0
        %418 = vmatpush1.bf16.msra.mxu0 0
        %419 = vmatprep.subr.bf16.mxu0 0
        %420 = vmatpush1.bf16.msra.mxu0 0
        %421 = vmatprep.subr.bf16.mxu0 0
        %422 = vmatpush1.bf16.msra.mxu0 0
        %423 = vmatprep.subr.bf16.mxu0 0
        %424 = vmatpush1.bf16.msra.mxu0 0
        %425 = vmatprep.subr.bf16.mxu0 0
        %426 = vmatpush1.bf16.msra.mxu0 0
        %427 = vmatprep.subr.bf16.mxu0 0
        %428 = vmatpush1.bf16.msra.mxu0 0
        %429 = vmatprep.subr.bf16.mxu0 0
        %430 = vmatpush1.bf16.msra.mxu0 0
        %431 = vmatprep.subr.bf16.mxu0 0
        %432 = vmatpush1.bf16.msra.mxu0 0
        %433 = vmatprep.subr.bf16.mxu0 0
        %434 = vmatpush1.bf16.msra.mxu0 0
        %435 = vmatprep.subr.bf16.mxu0 0
        %436 = vmatpush1.bf16.msra.mxu0 0
        %437 = vmatprep.mubr.bf16.mxu0 0
        %438 = vmatmul.mubr.bf16.gmra.mrb[0].mxu0 %v403
        %v439 = vpop.f32.mrb[0].mxu0
        %v440 = vadd.f32 0.0, %v439
        %v441 = vpop.f32.mrb[0].mxu0
        %v442 = vpop.f32.mrb[0].mxu0
        %v443 = vpop.f32.mrb[0].mxu0
        %444 = vdwg.mxu0
        %v445 = vadd.f32 %v380, %v440
        %v446 = vmul.f32 %v381, %v383
        %v447 = vsub.f32 %v446, %v311
        %v448 = vpack.c.bf16 %v447, %v447
        %s449 = scalar_lea.vmem [#allocation5], 32
        %v450 = vld [vmem:[%s449] sm:$0xf]
        %v451 = vld [vmem:[%s449 + $0x4] sm:$0xf]
        %v452 = vld [vmem:[%s449 + $0x8] sm:$0xf]
        %v453 = vld [vmem:[%s449 + $0xc] sm:$0xf]
        %v458 = vunpack.c.l.b16 %v450
        %v459 = vunpack.c.l.b16 %v451
        %v460 = vunpack.c.l.b16 %v452
        %v461 = vunpack.c.l.b16 %v453
        %v462 = vpack.c.b16 %v459, %v458
        %v463 = vpack.c.b16 %v461, %v460
        %v467 = vsel %vm330, %v448, 0
        %469 = vmatprep.subr.bf16.mxu0 0
        %470 = vmatpush1.bf16.msra.mxu0 %v462
        %471 = vmatprep.subr.bf16.mxu0 0
        %472 = vmatpush1.bf16.msra.mxu0 %v463
        %473 = vmatprep.subr.bf16.mxu0 0
        %474 = vmatpush1.bf16.msra.mxu0 0
        %475 = vmatprep.subr.bf16.mxu0 0
        %476 = vmatpush1.bf16.msra.mxu0 0
        %477 = vmatprep.subr.bf16.mxu0 0
        %478 = vmatpush1.bf16.msra.mxu0 0
        %479 = vmatprep.subr.bf16.mxu0 0
        %480 = vmatpush1.bf16.msra.mxu0 0
        %481 = vmatprep.subr.bf16.mxu0 0
        %482 = vmatpush1.bf16.msra.mxu0 0
        %483 = vmatprep.subr.bf16.mxu0 0
        %484 = vmatpush1.bf16.msra.mxu0 0
        %485 = vmatprep.subr.bf16.mxu0 0
        %486 = vmatpush1.bf16.msra.mxu0 0
        %487 = vmatprep.subr.bf16.mxu0 0
        %488 = vmatpush1.bf16.msra.mxu0 0
        %489 = vmatprep.subr.bf16.mxu0 0
        %490 = vmatpush1.bf16.msra.mxu0 0
        %491 = vmatprep.subr.bf16.mxu0 0
        %492 = vmatpush1.bf16.msra.mxu0 0
        %493 = vmatprep.subr.bf16.mxu0 0
        %494 = vmatpush1.bf16.msra.mxu0 0
        %495 = vmatprep.subr.bf16.mxu0 0
        %496 = vmatpush1.bf16.msra.mxu0 0
        %497 = vmatprep.subr.bf16.mxu0 0
        %498 = vmatpush1.bf16.msra.mxu0 0
        %499 = vmatprep.subr.bf16.mxu0 0
        %500 = vmatpush1.bf16.msra.mxu0 0
        %501 = vmatprep.mubr.bf16.mxu0 0
        %502 = vmatmul.mubr.bf16.gmra.mrb[0].mxu0 %v467
        %v503 = vpop.f32.mrb[0].mxu0
        %v504 = vadd.f32 0.0, %v503
        %v505 = vpop.f32.mrb[0].mxu0
        %v506 = vpop.f32.mrb[0].mxu0
        %v507 = vpop.f32.mrb[0].mxu0
        %508 = vdwg.mxu0
        %v509 = vadd.f32 %v445, %v504
        %v510 = vlaneseq
        %v511 = vshrl.u32 %v510, 7
        %vm512 = vcmp.lt.s32.totalorder %v511, 0
        %v513 = vsub.s32 0, %v511
        %v514 = vsel %vm512, %v513, %v511
        %v515 = vshrl.u32 %v514, 3
        %v516 = vand.u32 %v514, 7
        %v517 = vsub.s32 0, %v516
        %v518 = vsel %vm512, %v517, %v516
        %vm519 = vcmp.ne.s32.totalorder %v518, 0
        %vm520 = vcmp.lt.s32.totalorder %v518, 0
        %vm521 = vmand %vm520, %vm519
        %v522 = vadd.s32 %v518, 8
        %v523 = vsel %vm521, %v522, %v518
        %vm524 = vcmp.eq.s32.totalorder %v523, 0
        %v525 = vrot.slane %v310, 7
        %v526 = vsel %vm524, 1, 0
        %vm527 = vcmp.eq.s32.totalorder %v526, 1
        %v528 = vsel %vm527, 0.0, %v525
        %vm529 = vcmp.eq.s32.totalorder %v523, 7
        %v530 = vrot.slane %v310, 1
        %v531 = vsel %vm529, 1, 0
        %vm532 = vcmp.eq.s32.totalorder %v531, 1
        %v533 = vsel %vm532, 0.0, %v530
        %v534 = vld [vmem:[%s3] sm:$0x7]
        %v535 = vlaneseq
        %v536 = vshrl.u32 %v535, 7
        %v537 = vsub.s32 0, %v536
        %v538 = vrot.slane %v534, %v537
        %v539 = vmul.f32 %v538, %v528
        %v540 = vlaneseq
        %v541 = vshrl.u32 %v540, 7
        %v542 = vsub.s32 1, %v541
        %v543 = vrot.slane %v534, %v542
        %v544 = vmul.f32 %v543, %v310
        %v545 = vadd.f32 %v539, %v544
        %v546 = vlaneseq
        %v547 = vshrl.u32 %v546, 7
        %v548 = vsub.s32 2, %v547
        %v549 = vrot.slane %v534, %v548
        %v550 = vmul.f32 %v549, %v533
        %v551 = vadd.f32 %v545, %v550
        %v552 = vld [vmem:[%s4] sm:$0x1]
        %v554 = vlaneseq
        %v555 = vshrl.u32 %v554, 7
        %v556 = vsub.s32 0, %v555
        %v557 = vrot.slane %v552, %v556
        %v559 = vadd.f32 %v551, %v557
        %v560 = vadd.f32 %v310, %v509
        %v561 = vadd.f32 %v560, %v559
        %v562 = vsel %vm330, %v561, 0.0
        %563 = vadd.xlane.f32.xlu0 %v562
        %v564 = vpop.xlane.xlu0 %563
        %v565 = vmul.f32 %v564, 0.03125
        %v566 = vmul.f32 %v561, %v561
        %v567 = vsel %vm330, %v566, 0.0
        %568 = vadd.xlane.f32.xlu0 %v567
        %v569 = vpop.xlane.xlu0 %568
        %v570 = vmul.f32 %v569, 0.03125
        %v571 = vmul.f32 %v565, %v565
        %v572 = vsub.f32 %v570, %v571
        %v573 = vmax.f32 %v572, 0.0
        %v574 = vsub.f32 %v561, %v565
        %v575 = vadd.f32 %v573, 1e-05
        %v576 = vrsqrt.pop %v575
        %v577 = vmul.f32 %v574, %v576
        %v578 = vld [vmem:[%s5] sm:$0x1]
        %v580 = vlaneseq
        %v581 = vshrl.u32 %v580, 7
        %v582 = vsub.s32 0, %v581
        %v583 = vrot.slane %v578, %v582
        %v585 = vmul.f32 %v577, %v583
        %v586 = vld [vmem:[%s6] sm:$0x1]
        %v588 = vlaneseq
        %v589 = vshrl.u32 %v588, 7
        %v590 = vsub.s32 0, %v589
        %v591 = vrot.slane %v586, %v590
        %v593 = vadd.f32 %v585, %v591
        %594 = vst.msk [vmem:[%s308] sm:$0xff] %vm330, %v593
        %s595 = sand.u32 %s185, 1
        %s596 = scalar_lea.sflag [#allocation4], %s595
        %s597 = sand.u32 %s185, 1
        %s598 = smul.addr %s597, 8
        %s599 = scalar_lea.vmem [#allocation7], %s598
        // Predicated region
        $region57: #{tpu_custom_call.1} parent=47 // pred_check
          %p600 = pneg %p195
        $region58: #{tpu_custom_call.1} parent=47 // pred_check_branch
          %602 = sbr.rel (%p600) target = $region60
        $region59: #{tpu_custom_call.1} parent=47 // pred_region
          %s604 = ssub.s32 128, 128
          %605 = vsyncadd %s596, %s604
          %s606 = smul.addr %s25, 128
          %s607 = scalar_lea.hbm %s7, %s606
          %s609 = sshll.u32 %s599, 4
          %s610 = int_to_ptr.vmem [resolvable:$true] %s609
          %612 = dma.vmem_to_hbm [thread:$0]  %s610, 128, %s607, %s596
        $region60: #{tpu_custom_call.1} parent=47 // pred_fallthru
          _
      $region48: #{tpu_custom_call.1} parent=5 // pred_fallthru
        _
      %p613 = scmp.le.s32.totalorder 2, %s20
      // Predicated region
      $region61: #{tpu_custom_call.1} parent=5 // pred_check
        %p614 = pneg %p613
      $region62: #{tpu_custom_call.1} parent=5 // pred_check_branch
        %616 = sbr.rel (%p614) target = $region64
      $region63: #{tpu_custom_call.1} parent=5 // pred_region
        %s617 = ssub.s32 %s20, 2
        // Predicated region
        $region65: #{tpu_custom_call.1} parent=63 // pred_check
          %p618 = pneg %p201
        $region66: #{tpu_custom_call.1} parent=63 // pred_check_branch
          %620 = sbr.rel (%p618) target = $region68
        $region67: #{tpu_custom_call.1} parent=63 // pred_region
          %s621 = sand.u32 %s186, 1
          %s622 = scalar_lea.sflag [#allocation4], %s621
          %s623 = sand.u32 %s186, 1
          %s624 = smul.addr %s623, 8
          %s625 = scalar_lea.vmem [#allocation7], %s624
          %626 = dma.done %s622, 128
        $region68: #{tpu_custom_call.1} parent=63 // pred_fallthru
          _
      $region64: #{tpu_custom_call.1} parent=5 // pred_fallthru
        _
    $region6: #{tpu_custom_call.1} parent=1 // loop_footer
      %s24 = sadd.s32 1, %s20
    $region7: #{tpu_custom_call.1} parent=1 // loop_footer_branch
      %19 = sbr.rel target = $region3
    $region8: #{tpu_custom_call.1} parent=1 // loop_exit
      _
    %627 = vsyncpa [#allocation3], 1
    %s628 = scalar_lea.sflag [#allocation3], 1
    %629 = vsyncpa %s628, 1
    %630 = vsyncpa [#allocation6], 1
    %631 = vsyncpa [#allocation4], 1
    %s632 = scalar_lea.sflag [#allocation4], 1
    %633 = vsyncpa %s632, 1

</llo_original>
